<compile_context>
chip_gen: v5e
topology: v5e:2x2
jax: 0.10.0
libtpu: 0.0.40
codegen_flags: <defaults>
</compile_context>

<pallas_src>
import functools
import math

import jax
import jax.numpy as jnp
from jax.experimental import pallas as pl
from jax.experimental.pallas import tpu as pltpu

_LANES = 128  # vreg lane width


def _flash_sdpa_kernel(q_ref, k_ref, v_ref, o_ref, q_sc, m_sc, l_sc, acc_sc, *, scale):
    # q_ref: (Tq, D), k_ref/v_ref: (Tk, D), o_ref: (Tq, D)  (batch dim squeezed)
    ki = pl.program_id(2)

    @pl.when(ki == 0)
    def _init():
        # Fold the softmax scale into Q once per q tile (the Q block is
        # constant over the ki axis, so don't re-scale it every kv step).
        q32 = q_ref[...].astype(jnp.float32) * jnp.float32(scale)
        q_sc[...] = q32.astype(q_sc.dtype)
        m_sc[...] = jnp.full(m_sc.shape, -jnp.inf, dtype=m_sc.dtype)
        l_sc[...] = jnp.zeros(l_sc.shape, dtype=l_sc.dtype)
        acc_sc[...] = jnp.zeros(acc_sc.shape, dtype=acc_sc.dtype)

    # scores = (q * scale) @ k^T without materializing the transpose
    # (contract over D).  MXU operands stay in the input dtype (bf16 inputs ->
    # bf16 MXU), accumulation in f32.
    s = jax.lax.dot_general(
        q_sc[...], k_ref[...],
        dimension_numbers=(((1,), (1,)), ((), ())),
        preferred_element_type=jnp.float32,
    )  # (Tq, Tk) float32

    tk = s.shape[-1]
    m_prev = m_sc[...]                               # (Tq, 128), lanes all equal
    l_prev = l_sc[...]
    row_max = jnp.max(s, axis=-1, keepdims=True)     # (Tq, 1)
    m_next = jnp.maximum(m_prev, row_max)            # (Tq, 128)
    alpha = jnp.exp(m_prev - m_next)                 # rescale of previous state

    if tk % _LANES == 0:
        m_bcast = jnp.tile(m_next, (1, tk // _LANES))   # lane-dense broadcast
    else:
        m_bcast = m_next[:, :1]
    p = jnp.exp(s - m_bcast)                         # un-normalized weights
    # TODO(synk): on v6e/v7x with small D the single EUP exp slot binds; a
    # gen-gated bf16/exp2 score path could relieve it (not valid on v5e).

    l_sc[...] = alpha * l_prev + jnp.sum(p, axis=-1, keepdims=True)
    m_sc[...] = m_next
    acc_sc[...] = alpha[:, :1] * acc_sc[...] + jnp.dot(
        p.astype(v_ref.dtype), v_ref[...], preferred_element_type=jnp.float32)

    @pl.when(ki == pl.num_programs(2) - 1)
    def _finalize():
        # Exact reciprocal: runs once per q tile, negligible cost, tighter
        # parity with the reference softmax normalization.
        inv_l = pl.reciprocal(l_sc[...], approx=False)
        o_ref[...] = (acc_sc[...] * inv_l[:, :1]).astype(o_ref.dtype)


def _pick_tile(size, preferred):
    for t in preferred:
        if t <= size and size % t == 0:
            return t
    return size  # full extent (always legal: block dim == array dim)


def _select_tiles(Sq, Sk, D, itemsize, block_q, block_k):
    # Large q tiles cut K/V HBM re-streaming (traffic ~ Sq/tq); per-block VMEM
    # is small at these D, so there is headroom on all gens (incl. v7x 64 MiB).
    tq = block_q if block_q is not None else _pick_tile(Sq, (512, 256, 128, 64, 32, 16, 8))
    if block_k is not None:
        tk = block_k
    elif Sk <= 2048 and 2 * Sk * D * itemsize <= 8 * 2 ** 20:
        # K/V resident per batch: kv grid axis collapses, K/V DMA'd once per
        # batch instead of once per q tile.
        tk = Sk
    else:
        tk = _pick_tile(Sk, (512, 256, 128, 64, 32, 16, 8))
    if block_q is None:
        # Keep the f32 score tile (and its exp'd copy) modest to avoid spill.
        while tq >= 256 and tq % 2 == 0 and tq * tk * 4 > 4 * 2 ** 20:
            tq //= 2
    return tq, tk


def scaled_dot_product_attention(query, key, value, *, block_q=None, block_k=None):
    """Pallas equivalent of ScaledDotProductAttention.forward.

    query: [B, Sq, D], key/value: [B, Sk, D]  ->  [B, Sq, D]
    scaling_factor = rsqrt(D), exactly as in the PyTorch module.  Matmuls run
    on the MXU in the input dtype (feed bf16 for peak MXU throughput and half
    the K/V HBM bytes); accumulation is always f32.
    """
    B, Sq, D = query.shape
    _, Sk, Dk = key.shape
    assert Dk == D and value.shape == (B, Sk, D)

    # TODO(synk): for real multi-head shapes with D < 128, fold heads into the
    # feature axis caller-side so the lane dim is 128-dense (lane-dense output
    # stores + full MXU rows/cols); here D equals the full array dim so the
    # block shapes remain legal.

    itemsize = jnp.dtype(query.dtype).itemsize
    tq, tk = _select_tiles(Sq, Sk, D, itemsize, block_q, block_k)
    assert Sq % tq == 0 and Sk % tk == 0, "pad sequences to a multiple of the tile"
    num_k_steps = Sk // tk

    scale = 1.0 / math.sqrt(D)
    kernel = functools.partial(_flash_sdpa_kernel, scale=scale)

    # K/V are re-streamed once per q tile unless fully resident (tk == Sk).
    kv_factor = 1 if tk == Sk else Sq // tq
    cost = pl.CostEstimate(
        flops=4 * B * Sq * Sk * D,                 # two matmuls, 2 flops/MAC
        transcendentals=B * Sq * Sk,               # exp on the scores
        bytes_accessed=itemsize * (2 * B * Sq * D + kv_factor * 2 * B * Sk * D),
    )

    # Triple-buffer K/V when there are several kv steps so the short per-step
    # MXU work (small D) does not expose the HBM DMA latency.
    kv_kwargs = {"pipeline_mode": pl.Buffered(3)} if num_k_steps > 2 else {}
    kv_bufs = 3 if num_k_steps > 2 else 2

    # VMEM budget derived from the tile plan; clamp to v7x's 64 MiB physical.
    block_bytes = (2 * tq * D + 2 * kv_bufs * tk * D + 2 * tq * D) * itemsize
    scratch_bytes = tq * D * itemsize + 2 * tq * _LANES * 4 + tq * D * 4
    work_bytes = 6 * tq * tk * 4
    vmem_limit = int(min(max(2 * (block_bytes + scratch_bytes + work_bytes),
                             32 * 2 ** 20), 64 * 2 ** 20))

    grid = (B, Sq // tq, num_k_steps)

    return pl.pallas_call(
        kernel,
        out_shape=jax.ShapeDtypeStruct((B, Sq, D), query.dtype),
        grid_spec=pltpu.PrefetchScalarGridSpec(
            num_scalar_prefetch=0,
            grid=grid,
            in_specs=[
                pl.BlockSpec((None, tq, D), lambda b, qi, ki: (b, qi, 0)),
                pl.BlockSpec((None, tk, D), lambda b, qi, ki: (b, ki, 0), **kv_kwargs),
                pl.BlockSpec((None, tk, D), lambda b, qi, ki: (b, ki, 0), **kv_kwargs),
            ],
            out_specs=pl.BlockSpec((None, tq, D), lambda b, qi, ki: (b, qi, 0)),
            scratch_shapes=[
                pltpu.VMEM((tq, D), query.dtype),        # scaled Q (hoisted)
                pltpu.VMEM((tq, _LANES), jnp.float32),   # running max (lane-dense)
                pltpu.VMEM((tq, _LANES), jnp.float32),   # running denom (lane-dense)
                pltpu.VMEM((tq, D), jnp.float32),        # output accumulator
            ],
        ),
        compiler_params=pltpu.CompilerParams(
            dimension_semantics=("parallel", "parallel", "arbitrary"),
            vmem_limit_bytes=vmem_limit,
        ),
        cost_estimate=cost,
    )(query, key, value)


def _reference(query, key, value):
    d = query.shape[-1]
    q = query.astype(jnp.float32)
    k = key.astype(jnp.float32)
    v = value.astype(jnp.float32)
    scores = jnp.einsum("bqd,bkd->bqk", q, k) * jax.lax.rsqrt(jnp.float32(d))
    weights = jax.nn.softmax(scores, axis=-1)
    return jnp.einsum("bqk,bkd->bqd", weights, v)


if __name__ == "__main__":
    # 1) Small shapes matching the module spec: batch=2, seq=8, features=32.
    kq, kk, kv = jax.random.split(jax.random.PRNGKey(0), 3)
    B, S, D = 2, 8, 32
    q = jax.random.normal(kq, (B, S, D), jnp.float32)
    k = jax.random.normal(kk, (B, S, D), jnp.float32)
    v = jax.random.normal(kv, (B, S, D), jnp.float32)
    out = jax.block_until_ready(scaled_dot_product_attention(q, k, v))
    assert out.shape == (B, S, D)
    assert jnp.allclose(out, _reference(q, k, v), atol=2e-3, rtol=2e-3), "mismatch (small)"

    # 2) Multi-tile online-softmax path (several q and kv blocks).
    kq, kk, kv = jax.random.split(jax.random.PRNGKey(1), 3)
    B2, S2, D2 = 2, 256, 32
    q2 = jax.random.normal(kq, (B2, S2, D2), jnp.float32)
    k2 = jax.random.normal(kk, (B2, S2, D2), jnp.float32)
    v2 = jax.random.normal(kv, (B2, S2, D2), jnp.float32)
    out2 = jax.block_until_ready(
        scaled_dot_product_attention(q2, k2, v2, block_q=128, block_k=128))
    assert jnp.allclose(out2, _reference(q2, k2, v2), atol=2e-3, rtol=2e-3), "mismatch (tiled)"

    # 3) Deeper kv streaming (4 kv steps -> Buffered(3) K/V pipeline).
    kq, kk, kv = jax.random.split(jax.random.PRNGKey(2), 3)
    B3, S3, D3 = 2, 512, 64
    q3 = jax.random.normal(kq, (B3, S3, D3), jnp.float32)
    k3 = jax.random.normal(kk, (B3, S3, D3), jnp.float32)
    v3 = jax.random.normal(kv, (B3, S3, D3), jnp.float32)
    out3 = jax.block_until_ready(
        scaled_dot_product_attention(q3, k3, v3, block_q=128, block_k=128))
    assert jnp.allclose(out3, _reference(q3, k3, v3), atol=5e-3, rtol=5e-3), "mismatch (buffered)"

    # 4) bf16 inputs: matmuls run on the MXU in bf16 (f32 accumulation).
    kq, kk, kv = jax.random.split(jax.random.PRNGKey(3), 3)
    B4, S4, D4 = 2, 256, 32
    q4 = jax.random.normal(kq, (B4, S4, D4), jnp.bfloat16)
    k4 = jax.random.normal(kk, (B4, S4, D4), jnp.bfloat16)
    v4 = jax.random.normal(kv, (B4, S4, D4), jnp.bfloat16)
    out4 = jax.block_until_ready(scaled_dot_product_attention(q4, k4, v4))
    assert jnp.allclose(out4.astype(jnp.float32), _reference(q4, k4, v4),
                        atol=3e-2, rtol=3e-2), "mismatch (bf16)"

    print("KERNEL_OK")
</pallas_src>

<mosaic_0001>
module attributes {stable_mosaic.version = 11 : i64} {
  func.func @_flash_sdpa_kernel(%arg0: i32, %arg1: i32, %arg2: i32, %arg3: memref<1x8x32xf32, #tpu.memory_space<vmem>>, %arg4: memref<1x8x32xf32, #tpu.memory_space<vmem>>, %arg5: memref<1x8x32xf32, #tpu.memory_space<vmem>>, %arg6: memref<1x8x32xf32, #tpu.memory_space<vmem>>, %arg7: memref<8x32xf32, #tpu.memory_space<vmem>>, %arg8: memref<8x128xf32, #tpu.memory_space<vmem>>, %arg9: memref<8x128xf32, #tpu.memory_space<vmem>>, %arg10: memref<8x32xf32, #tpu.memory_space<vmem>>) attributes {dimension_semantics = [#tpu.dimension_semantics<parallel>, #tpu.dimension_semantics<parallel>, #tpu.dimension_semantics<arbitrary>], iteration_bounds = array<i64: 2, 1, 1>, scalar_prefetch = 0 : i64, scratch_operands = 4 : i64, tpu.core_type = #tpu.core_type<tc>, window_params = [{transform_indices = @transform_0, window_bounds = array<i64: 1, 8, 32>}, {transform_indices = @transform_1, window_bounds = array<i64: 1, 8, 32>}, {transform_indices = @transform_2, window_bounds = array<i64: 1, 8, 32>}, {transform_indices = @transform_3, window_bounds = array<i64: 1, 8, 32>}]} {
    %c0_i32 = arith.constant 0 : i32
    %0 = arith.cmpi eq, %arg2, %c0_i32 : i32
    %1 = arith.extui %0 : i1 to i32
    %c0_i32_0 = arith.constant 0 : i32
    %2 = arith.cmpi ne, %1, %c0_i32_0 : i32
    scf.if %2 {
      %c0_25 = arith.constant 0 : index
      %c0_26 = arith.constant 0 : index
      %c0_27 = arith.constant 0 : index
      %38 = vector.load %arg3[%c0_25, %c0_26, %c0_27] : memref<1x8x32xf32, #tpu.memory_space<vmem>>, vector<1x8x32xf32>
      %39 = vector.shape_cast %38 : vector<1x8x32xf32> to vector<8x32xf32>
      %cst_28 = arith.constant 0.176776692 : f32
      %40 = vector.broadcast %cst_28 : f32 to vector<8x32xf32>
      %41 = arith.mulf %39, %40 : vector<8x32xf32>
      %c0_29 = arith.constant 0 : index
      %c0_30 = arith.constant 0 : index
      %42 = vector.load %arg7[%c0_29, %c0_30] : memref<8x32xf32, #tpu.memory_space<vmem>>, vector<8x32xf32>
      tpu.vector_store %arg7[%c0_29, %c0_30], %41 {strides = array<i32>} : memref<8x32xf32, #tpu.memory_space<vmem>>, vector<8x32xf32>,
      %cst_31 = arith.constant 0xFF800000 : f32
      %43 = vector.broadcast %cst_31 : f32 to vector<8x128xf32>
      %c0_32 = arith.constant 0 : index
      %c0_33 = arith.constant 0 : index
      %44 = vector.load %arg8[%c0_32, %c0_33] : memref<8x128xf32, #tpu.memory_space<vmem>>, vector<8x128xf32>
      tpu.vector_store %arg8[%c0_32, %c0_33], %43 {strides = array<i32>} : memref<8x128xf32, #tpu.memory_space<vmem>>, vector<8x128xf32>,
      %cst_34 = arith.constant 0.000000e+00 : f32
      %45 = vector.broadcast %cst_34 : f32 to vector<8x128xf32>
      %c0_35 = arith.constant 0 : index
      %c0_36 = arith.constant 0 : index
      %46 = vector.load %arg9[%c0_35, %c0_36] : memref<8x128xf32, #tpu.memory_space<vmem>>, vector<8x128xf32>
      tpu.vector_store %arg9[%c0_35, %c0_36], %45 {strides = array<i32>} : memref<8x128xf32, #tpu.memory_space<vmem>>, vector<8x128xf32>,
      %cst_37 = arith.constant 0.000000e+00 : f32
      %47 = vector.broadcast %cst_37 : f32 to vector<8x32xf32>
      %c0_38 = arith.constant 0 : index
      %c0_39 = arith.constant 0 : index
      %48 = vector.load %arg10[%c0_38, %c0_39] : memref<8x32xf32, #tpu.memory_space<vmem>>, vector<8x32xf32>
      tpu.vector_store %arg10[%c0_38, %c0_39], %47 {strides = array<i32>} : memref<8x32xf32, #tpu.memory_space<vmem>>, vector<8x32xf32>,
    } else {
    }
    %c0 = arith.constant 0 : index
    %c0_1 = arith.constant 0 : index
    %3 = vector.load %arg7[%c0, %c0_1] : memref<8x32xf32, #tpu.memory_space<vmem>>, vector<8x32xf32>
    %c0_2 = arith.constant 0 : index
    %c0_3 = arith.constant 0 : index
    %c0_4 = arith.constant 0 : index
    %4 = vector.load %arg4[%c0_2, %c0_3, %c0_4] : memref<1x8x32xf32, #tpu.memory_space<vmem>>, vector<1x8x32xf32>
    %5 = vector.shape_cast %4 : vector<1x8x32xf32> to vector<8x32xf32>
    %cst = arith.constant dense<0.000000e+00> : vector<8x8xf32>
    %6 = tpu.matmul %3, %5, %cst {dimension_numbers = #tpu.dot_dimension_numbers<[1], [1], [0], [0], [0, 0, 1, 0], [], []>} : vector<8x32xf32>, vector<8x32xf32>, vector<8x8xf32> -> vector<8x8xf32>
    %c0_5 = arith.constant 0 : index
    %c0_6 = arith.constant 0 : index
    %7 = vector.load %arg8[%c0_5, %c0_6] : memref<8x128xf32, #tpu.memory_space<vmem>>, vector<8x128xf32>
    %c0_7 = arith.constant 0 : index
    %c0_8 = arith.constant 0 : index
    %8 = vector.load %arg9[%c0_7, %c0_8] : memref<8x128xf32, #tpu.memory_space<vmem>>, vector<8x128xf32>
    %cst_9 = arith.constant dense<0xFF800000> : vector<8xf32>
    %9 = vector.multi_reduction <maximumf>, %6, %cst_9 [1] : vector<8x8xf32> to vector<8xf32>
    %10 = vector.shape_cast %9 : vector<8xf32> to vector<8x1xf32>
    %11 = vector.broadcast %10 : vector<8x1xf32> to vector<8x128xf32>
    %12 = arith.maximumf %7, %11 : vector<8x128xf32>
    %13 = arith.subf %7, %12 : vector<8x128xf32>
    %14 = math.exp %13 : vector<8x128xf32>
    %15 = vector.extract_strided_slice %12 {offsets = [0, 0], sizes = [8, 1], strides = [1, 1]} : vector<8x128xf32> to vector<8x1xf32>
    %16 = vector.broadcast %15 : vector<8x1xf32> to vector<8x8xf32>
    %17 = arith.subf %6, %16 : vector<8x8xf32>
    %18 = math.exp %17 : vector<8x8xf32>
    %19 = arith.mulf %14, %8 : vector<8x128xf32>
    %cst_10 = arith.constant dense<0.000000e+00> : vector<8xf32>
    %20 = vector.multi_reduction <add>, %18, %cst_10 [1] : vector<8x8xf32> to vector<8xf32>
    %21 = vector.shape_cast %20 : vector<8xf32> to vector<8x1xf32>
    %22 = vector.broadcast %21 : vector<8x1xf32> to vector<8x128xf32>
    %23 = arith.addf %19, %22 : vector<8x128xf32>
    %c0_11 = arith.constant 0 : index
    %c0_12 = arith.constant 0 : index
    %24 = vector.load %arg9[%c0_11, %c0_12] : memref<8x128xf32, #tpu.memory_space<vmem>>, vector<8x128xf32>
    tpu.vector_store %arg9[%c0_11, %c0_12], %23 {strides = array<i32>} : memref<8x128xf32, #tpu.memory_space<vmem>>, vector<8x128xf32>,
    %c0_13 = arith.constant 0 : index
    %c0_14 = arith.constant 0 : index
    %25 = vector.load %arg8[%c0_13, %c0_14] : memref<8x128xf32, #tpu.memory_space<vmem>>, vector<8x128xf32>
    tpu.vector_store %arg8[%c0_13, %c0_14], %12 {strides = array<i32>} : memref<8x128xf32, #tpu.memory_space<vmem>>, vector<8x128xf32>,
    %26 = vector.extract_strided_slice %14 {offsets = [0, 0], sizes = [8, 1], strides = [1, 1]} : vector<8x128xf32> to vector<8x1xf32>
    %c0_15 = arith.constant 0 : index
    %c0_16 = arith.constant 0 : index
    %27 = vector.load %arg10[%c0_15, %c0_16] : memref<8x32xf32, #tpu.memory_space<vmem>>, vector<8x32xf32>
    %28 = vector.broadcast %26 : vector<8x1xf32> to vector<8x32xf32>
    %29 = arith.mulf %28, %27 : vector<8x32xf32>
    %c0_17 = arith.constant 0 : index
    %c0_18 = arith.constant 0 : index
    %c0_19 = arith.constant 0 : index
    %30 = vector.load %arg5[%c0_17, %c0_18, %c0_19] : memref<1x8x32xf32, #tpu.memory_space<vmem>>, vector<1x8x32xf32>
    %31 = vector.shape_cast %30 : vector<1x8x32xf32> to vector<8x32xf32>
    %cst_20 = arith.constant dense<0.000000e+00> : vector<8x32xf32>
    %32 = tpu.matmul %18, %31, %cst_20 {dimension_numbers = #tpu.dot_dimension_numbers<[1], [0], [0], [1], [0, 0, 1, 1], [], []>} : vector<8x8xf32>, vector<8x32xf32>, vector<8x32xf32> -> vector<8x32xf32>
    %33 = arith.addf %29, %32 : vector<8x32xf32>
    %c0_21 = arith.constant 0 : index
    %c0_22 = arith.constant 0 : index
    %34 = vector.load %arg10[%c0_21, %c0_22] : memref<8x32xf32, #tpu.memory_space<vmem>>, vector<8x32xf32>
    tpu.vector_store %arg10[%c0_21, %c0_22], %33 {strides = array<i32>} : memref<8x32xf32, #tpu.memory_space<vmem>>, vector<8x32xf32>,
    %c0_i32_23 = arith.constant 0 : i32
    %35 = arith.cmpi eq, %arg2, %c0_i32_23 : i32
    %36 = arith.extui %35 : i1 to i32
    %c0_i32_24 = arith.constant 0 : i32
    %37 = arith.cmpi ne, %36, %c0_i32_24 : i32
    scf.if %37 {
      %c0_25 = arith.constant 0 : index
      %c0_26 = arith.constant 0 : index
      %38 = vector.load %arg9[%c0_25, %c0_26] : memref<8x128xf32, #tpu.memory_space<vmem>>, vector<8x128xf32>
      %39 = tpu.reciprocal %38 : vector<8x128xf32> -> vector<8x128xf32>
      %c0_27 = arith.constant 0 : index
      %c0_28 = arith.constant 0 : index
      %40 = vector.load %arg10[%c0_27, %c0_28] : memref<8x32xf32, #tpu.memory_space<vmem>>, vector<8x32xf32>
      %41 = vector.extract_strided_slice %39 {offsets = [0, 0], sizes = [8, 1], strides = [1, 1]} : vector<8x128xf32> to vector<8x1xf32>
      %42 = vector.broadcast %41 : vector<8x1xf32> to vector<8x32xf32>
      %43 = arith.mulf %40, %42 : vector<8x32xf32>
      %c0_29 = arith.constant 0 : index
      %c0_30 = arith.constant 0 : index
      %c0_31 = arith.constant 0 : index
      %44 = vector.load %arg6[%c0_29, %c0_30, %c0_31] : memref<1x8x32xf32, #tpu.memory_space<vmem>>, vector<1x8x32xf32>
      %45 = vector.shape_cast %44 : vector<1x8x32xf32> to vector<8x32xf32>
      %46 = vector.shape_cast %43 : vector<8x32xf32> to vector<1x8x32xf32>
      tpu.vector_store %arg6[%c0_29, %c0_30, %c0_31], %46 {strides = array<i32>} : memref<1x8x32xf32, #tpu.memory_space<vmem>>, vector<1x8x32xf32>,
    } else {
    }
    return
  }
  func.func @transform_0(%arg0: i32, %arg1: i32, %arg2: i32) -> (i32, i32, i32) {
    %c0_i32 = arith.constant 0 : i32
    %c0_i32_0 = arith.constant 0 : i32
    return %arg0, %arg1, %c0_i32 : i32, i32, i32
  }
  func.func @transform_1(%arg0: i32, %arg1: i32, %arg2: i32) -> (i32, i32, i32) {
    %c0_i32 = arith.constant 0 : i32
    %c0_i32_0 = arith.constant 0 : i32
    return %arg0, %arg2, %c0_i32 : i32, i32, i32
  }
  func.func @transform_2(%arg0: i32, %arg1: i32, %arg2: i32) -> (i32, i32, i32) {
    %c0_i32 = arith.constant 0 : i32
    %c0_i32_0 = arith.constant 0 : i32
    return %arg0, %arg2, %c0_i32 : i32, i32, i32
  }
  func.func @transform_3(%arg0: i32, %arg1: i32, %arg2: i32) -> (i32, i32, i32) {
    %c0_i32 = arith.constant 0 : i32
    %c0_i32_0 = arith.constant 0 : i32
    return %arg0, %arg1, %c0_i32 : i32, i32, i32
  }
}

</mosaic_0001>

<llo_original>
// kernel: tpu_custom_call.1
$region0: #{tpu_custom_call.1}
  #allocation0 [shape = 'u32[]', space=smem, size = 0x4, offset = 0x4, fixed_abs, tag = 'smem constant byte address 0x4 - core index']
  #allocation1 [shape = 'u32[72,128]{1,0:T(1,128)}', space=vmem, size = 0x9000, scoped, tag = 'internal scratch']
  #allocation2 [shape = 'f32[8,32]{1,0:T(8,128)}', space=vmem, size = 0x1000, scoped, tag = 'scratch operand']
  #allocation3 [shape = 'f32[8,128]{1,0:T(8,128)}', space=vmem, size = 0x1000, scoped, tag = 'scratch operand']
  #allocation4 [shape = 'f32[8,128]{1,0:T(8,128)}', space=vmem, size = 0x1000, scoped, tag = 'scratch operand']
  #allocation5 [shape = 'f32[8,32]{1,0:T(8,128)}', space=vmem, size = 0x1000, scoped, tag = 'scratch operand']
  %s0 = inlined_call_operand.hbm [shape: f32[2,8,32], index: 0, kind: input, shape index: {}]
  %s1 = inlined_call_operand.hbm [shape: f32[2,8,32], index: 1, kind: input, shape index: {}]
  %s2 = inlined_call_operand.hbm [shape: f32[2,8,32], index: 2, kind: input, shape index: {}]
  %s3 = inlined_call_operand.hbm [shape: f32[2,8,32], index: 3, kind: output, shape index: {}]
  %s4 = sld [smem:[#allocation0]]
  $region65: #{tpu_custom_call.1} parent=0
    _
  %s6 = ssub.s32 1, %s4
  %s7 = scalar_select 0, %s6, %s4
  $region1: #{tpu_custom_call.1} parent=0
    #allocation6 [shape = 'u8[8192]{0}', space=vmem, size = 0x2000, scoped, tag = 'input window, operand 0']
    #allocation7 [shape = 's32[2]{0}', space=sflag, size = 0x8, scoped, tag = 'scoped memory for tpu_custom_call.1']
    #allocation8 [shape = 's32[2]{0}', space=sflag, size = 0x8, scoped, tag = 'scoped memory for tpu_custom_call.1']
    #allocation9 [shape = 'u8[8192]{0}', space=vmem, size = 0x2000, scoped, tag = 'input window, operand 1']
    #allocation10 [shape = 's32[2]{0}', space=sflag, size = 0x8, scoped, tag = 'scoped memory for tpu_custom_call.1']
    #allocation11 [shape = 'u8[8192]{0}', space=vmem, size = 0x2000, scoped, tag = 'input window, operand 2']
    #allocation12 [shape = 'u8[8192]{0}', space=vmem, size = 0x2000, scoped, tag = 'output window, operand 0']
    %8 = vsyncpa [#allocation7], 0
    %s9 = scalar_lea.sflag [#allocation7], 1
    %10 = vsyncpa %s9, 0
    %11 = vsyncpa [#allocation10], 0
    %s12 = scalar_lea.sflag [#allocation10], 1
    %13 = vsyncpa %s12, 0
    %14 = vsyncpa [#allocation8], 0
    %s15 = scalar_lea.sflag [#allocation8], 1
    %16 = vsyncpa %s15, 0
    loop: start=0, step=1, limit=4
    $region2: #{tpu_custom_call.1} parent=1 // loop_pre_header
      _
    $region3: #{tpu_custom_call.1} parent=1 // loop_header
      %s18 = sphi 0, %s22
      %p19 = scmp.ge.s32.totalorder %s18, 4
      %s25 = sphi 0, %s44
      %s26 = sphi 0, %s40
      %s27 = sphi 0, %s36
      %s28 = sphi 0, %s25
      %s29 = sphi 0, %s26
      %s30 = sphi 0, %s27
      %s31 = sphi 0, %s28
      %s32 = sphi 0, %s29
      %s33 = sphi 0, %s30
      %s49 = sphi 0, %s51
      %s52 = sphi 0, %s49
      %s53 = sphi 0, %s52
      %s69 = sphi 0, %s53
      %s77 = sphi 0, %s79
      %s80 = sphi 0, %s77
      %s81 = sphi 0, %s80
      %s97 = sphi 0, %s81
      %s105 = sphi 0, %s107
      %s108 = sphi 0, %s105
      %s109 = sphi 0, %s108
      %s125 = sphi 0, %s109
      %s133 = sphi 0, %s135
      %s136 = sphi 0, %s133
      %s137 = sphi 0, %s136
      %s153 = sphi 0, %s137
    $region4: #{tpu_custom_call.1} parent=1 // loop_header_branch
      %21 = sbr.rel (%p19) target = $region8
    $region5: #{tpu_custom_call.1} parent=1 // loop_body
      %s23 = ssub.s32 %s18, 1
      %s24 = ssub.s32 %s18, 2
      %s34 = sadd.s32 1, %s27
      %p35 = scmp.ge.s32.totalorder %s34, 1
      %s36 = scalar_select %p35, 0, %s34
      %s37 = sadd.s32 1, %s26
      %s38 = scalar_select %p35, %s37, %s26
      %p39 = scmp.ge.s32.totalorder %s38, 1
      %s40 = scalar_select %p39, 0, %s38
      %s41 = sadd.s32 1, %s25
      %s42 = scalar_select %p39, %s41, %s25
      %p43 = scmp.ge.s32.totalorder %s42, 2
      %s44 = scalar_select %p43, 0, %s42
      %s45 = ssub.s32 %s25, %s44
      %s46 = ssub.s32 %s26, %s40
      %s47 = sor.u32 %s45, %s46
      %p48 = scmp.eq.s32.totalorder %s47, 0
      %s50 = sadd.s32 %s49, 1
      %s51 = scalar_select %p48, %s49, %s50
      %p54 = pneg %p48
      %p55 = scmp.eq.s32.totalorder %s18, 1
      %p56 = por %p54, %p55
      %p57 = scmp.ne.s32.totalorder %s49, %s52
      %p58 = scmp.eq.s32.totalorder %s18, 0
      %p59 = por %p57, %p58
      %p60 = scmp.ne.s32.totalorder %s49, %s52
      %p61 = scmp.eq.s32.totalorder %s23, 1
      %p62 = por %p60, %p61
      %p63 = scmp.ne.s32.totalorder %s52, %s53
      %p64 = scmp.eq.s32.totalorder %s23, 0
      %p65 = por %p63, %p64
      %p66 = scmp.ne.s32.totalorder %s52, %s53
      %p67 = scmp.eq.s32.totalorder %s24, 1
      %p68 = por %p66, %p67
      %p70 = scmp.ne.s32.totalorder %s53, %s69
      %p71 = scmp.eq.s32.totalorder %s24, 0
      %p72 = por %p70, %p71
      %s73 = ssub.s32 %s25, %s44
      %s74 = ssub.s32 %s27, %s36
      %s75 = sor.u32 %s73, %s74
      %p76 = scmp.eq.s32.totalorder %s75, 0
      %s78 = sadd.s32 %s77, 1
      %s79 = scalar_select %p76, %s77, %s78
      %p82 = pneg %p76
      %p83 = scmp.eq.s32.totalorder %s18, 1
      %p84 = por %p82, %p83
      %p85 = scmp.ne.s32.totalorder %s77, %s80
      %p86 = scmp.eq.s32.totalorder %s18, 0
      %p87 = por %p85, %p86
      %p88 = scmp.ne.s32.totalorder %s77, %s80
      %p89 = scmp.eq.s32.totalorder %s23, 1
      %p90 = por %p88, %p89
      %p91 = scmp.ne.s32.totalorder %s80, %s81
      %p92 = scmp.eq.s32.totalorder %s23, 0
      %p93 = por %p91, %p92
      %p94 = scmp.ne.s32.totalorder %s80, %s81
      %p95 = scmp.eq.s32.totalorder %s24, 1
      %p96 = por %p94, %p95
      %p98 = scmp.ne.s32.totalorder %s81, %s97
      %p99 = scmp.eq.s32.totalorder %s24, 0
      %p100 = por %p98, %p99
      %s101 = ssub.s32 %s25, %s44
      %s102 = ssub.s32 %s27, %s36
      %s103 = sor.u32 %s101, %s102
      %p104 = scmp.eq.s32.totalorder %s103, 0
      %s106 = sadd.s32 %s105, 1
      %s107 = scalar_select %p104, %s105, %s106
      %p110 = pneg %p104
      %p111 = scmp.eq.s32.totalorder %s18, 1
      %p112 = por %p110, %p111
      %p113 = scmp.ne.s32.totalorder %s105, %s108
      %p114 = scmp.eq.s32.totalorder %s18, 0
      %p115 = por %p113, %p114
      %p116 = scmp.ne.s32.totalorder %s105, %s108
      %p117 = scmp.eq.s32.totalorder %s23, 1
      %p118 = por %p116, %p117
      %p119 = scmp.ne.s32.totalorder %s108, %s109
      %p120 = scmp.eq.s32.totalorder %s23, 0
      %p121 = por %p119, %p120
      %p122 = scmp.ne.s32.totalorder %s108, %s109
      %p123 = scmp.eq.s32.totalorder %s24, 1
      %p124 = por %p122, %p123
      %p126 = scmp.ne.s32.totalorder %s109, %s125
      %p127 = scmp.eq.s32.totalorder %s24, 0
      %p128 = por %p126, %p127
      %s129 = ssub.s32 %s25, %s44
      %s130 = ssub.s32 %s26, %s40
      %s131 = sor.u32 %s129, %s130
      %p132 = scmp.eq.s32.totalorder %s131, 0
      %s134 = sadd.s32 %s133, 1
      %s135 = scalar_select %p132, %s133, %s134
      %p138 = pneg %p132
      %p139 = scmp.eq.s32.totalorder %s18, 1
      %p140 = por %p138, %p139
      %p141 = scmp.ne.s32.totalorder %s133, %s136
      %p142 = scmp.eq.s32.totalorder %s18, 0
      %p143 = por %p141, %p142
      %p144 = scmp.ne.s32.totalorder %s133, %s136
      %p145 = scmp.eq.s32.totalorder %s23, 1
      %p146 = por %p144, %p145
      %p147 = scmp.ne.s32.totalorder %s136, %s137
      %p148 = scmp.eq.s32.totalorder %s23, 0
      %p149 = por %p147, %p148
      %p150 = scmp.ne.s32.totalorder %s136, %s137
      %p151 = scmp.eq.s32.totalorder %s24, 1
      %p152 = por %p150, %p151
      %p154 = scmp.ne.s32.totalorder %s137, %s153
      %p155 = scmp.eq.s32.totalorder %s24, 0
      %p156 = por %p154, %p155
      %p157 = scmp.le.s32.totalorder 1, %s18
      %p158 = scmp.lt.s32.totalorder %s18, 3
      %p159 = pnand %p157, %p158
      %p160 = pneg %p159
      // Predicated region
      $region9: #{tpu_custom_call.1} parent=5 // pred_check
        _
      $region10: #{tpu_custom_call.1} parent=5 // pred_check_branch
        %162 = sbr.rel (%p159) target = $region12
      $region11: #{tpu_custom_call.1} parent=5 // pred_region
        %s163 = ssub.s32 %s18, 1
      $region12: #{tpu_custom_call.1} parent=5 // pred_fallthru
        _
      %p164 = scmp.lt.s32.totalorder %s18, 2
      // Predicated region
      $region13: #{tpu_custom_call.1} parent=5 // pred_check
        %p165 = pneg %p164
      $region14: #{tpu_custom_call.1} parent=5 // pred_check_branch
        %167 = sbr.rel (%p165) target = $region16
      $region15: #{tpu_custom_call.1} parent=5 // pred_region
        // Predicated region
        $region17: #{tpu_custom_call.1} parent=15 // pred_check
          %p168 = pneg %p59
        $region18: #{tpu_custom_call.1} parent=15 // pred_check_branch
          %170 = sbr.rel (%p168) target = $region20
        $region19: #{tpu_custom_call.1} parent=15 // pred_region
          %s171 = sand.u32 %s49, 1
          %s172 = scalar_lea.sflag [#allocation7], %s171
          %s173 = sand.u32 %s49, 1
          %s174 = smul.addr %s173, 8
          %s175 = scalar_lea.vmem [#allocation6], %s174
          %177 = vsyncadd %s172, 0
          %s178 = sadd.s32 %s26, %s25
          %s179 = smul.addr %s178, 8
          %s180 = scalar_lea.hbm %s0, %s179
          %s182 = sshll.u32 %s180, 4
          %s183 = int_to_ptr.hbm [resolvable:$true] %s182
          %s184 = sshll.u32 %s175, 4
          %s185 = int_to_ptr.vmem [resolvable:$true] %s184
          %187 = dma.hbm_to_vmem [thread:$0]  %s183, 128, %s185, %s172
        $region20: #{tpu_custom_call.1} parent=15 // pred_fallthru
          _
        // Predicated region
        $region21: #{tpu_custom_call.1} parent=15 // pred_check
          %p188 = pneg %p87
        $region22: #{tpu_custom_call.1} parent=15 // pred_check_branch
          %190 = sbr.rel (%p188) target = $region24
        $region23: #{tpu_custom_call.1} parent=15 // pred_region
          %s191 = sand.u32 %s18, 1
          %s192 = scalar_lea.sflag [#allocation10], %s191
          %s193 = sand.u32 %s77, 1
          %s194 = smul.addr %s193, 8
          %s195 = scalar_lea.vmem [#allocation9], %s194
          %197 = vsyncadd %s192, 0
          %s198 = sadd.s32 %s27, %s25
          %s199 = smul.addr %s198, 8
          %s200 = scalar_lea.hbm %s1, %s199
          %s202 = sshll.u32 %s200, 4
          %s203 = int_to_ptr.hbm [resolvable:$true] %s202
          %s204 = sshll.u32 %s195, 4
          %s205 = int_to_ptr.vmem [resolvable:$true] %s204
          %207 = dma.hbm_to_vmem [thread:$0]  %s203, 128, %s205, %s192
        $region24: #{tpu_custom_call.1} parent=15 // pred_fallthru
          _
        // Predicated region
        $region25: #{tpu_custom_call.1} parent=15 // pred_check
          %p208 = pneg %p115
        $region26: #{tpu_custom_call.1} parent=15 // pred_check_branch
          %210 = sbr.rel (%p208) target = $region28
        $region27: #{tpu_custom_call.1} parent=15 // pred_region
          %s211 = sand.u32 %s18, 1
          %s212 = scalar_lea.sflag [#allocation10], %s211
          %s213 = sand.u32 %s105, 1
          %s214 = smul.addr %s213, 8
          %s215 = scalar_lea.vmem [#allocation11], %s214
          %217 = vsyncadd %s212, 0
          %s218 = sadd.s32 %s27, %s25
          %s219 = smul.addr %s218, 8
          %s220 = scalar_lea.hbm %s2, %s219
          %s222 = sshll.u32 %s220, 4
          %s223 = int_to_ptr.hbm [resolvable:$true] %s222
          %s224 = sshll.u32 %s215, 4
          %s225 = int_to_ptr.vmem [resolvable:$true] %s224
          %227 = dma.hbm_to_vmem [thread:$0]  %s223, 128, %s225, %s212
        $region28: #{tpu_custom_call.1} parent=15 // pred_fallthru
          _
      $region16: #{tpu_custom_call.1} parent=5 // pred_fallthru
        _
      %p228 = scmp.le.s32.totalorder 1, %s18
      %p229 = scmp.lt.s32.totalorder %s18, 3
      %p230 = pnand %p228, %p229
      %p231 = pneg %p230
      // Predicated region
      $region29: #{tpu_custom_call.1} parent=5 // pred_check
        _
      $region30: #{tpu_custom_call.1} parent=5 // pred_check_branch
        %233 = sbr.rel (%p230) target = $region32
      $region31: #{tpu_custom_call.1} parent=5 // pred_region
        %s234 = ssub.s32 %s18, 1
        %s235 = sand.u32 %s52, 1
        %s236 = scalar_lea.sflag [#allocation7], %s235
        %s237 = sand.u32 %s52, 1
        %s238 = smul.addr %s237, 8
        %s239 = scalar_lea.vmem [#allocation6], %s238
        // Predicated region
        $region33: #{tpu_custom_call.1} parent=31 // pred_check
          %p240 = pneg %p65
        $region34: #{tpu_custom_call.1} parent=31 // pred_check_branch
          %242 = sbr.rel (%p240) target = $region36
        $region35: #{tpu_custom_call.1} parent=31 // pred_region
          %244 = dma.done %s236, 128
        $region36: #{tpu_custom_call.1} parent=31 // pred_fallthru
          _
        %s245 = sand.u32 %s23, 1
        %s246 = scalar_lea.sflag [#allocation10], %s245
        %s247 = sand.u32 %s80, 1
        %s248 = smul.addr %s247, 8
        %s249 = scalar_lea.vmem [#allocation9], %s248
        // Predicated region
        $region37: #{tpu_custom_call.1} parent=31 // pred_check
          %p250 = pneg %p93
        $region38: #{tpu_custom_call.1} parent=31 // pred_check_branch
          %252 = sbr.rel (%p250) target = $region40
        $region39: #{tpu_custom_call.1} parent=31 // pred_region
          %254 = dma.done %s246, 128
        $region40: #{tpu_custom_call.1} parent=31 // pred_fallthru
          _
        %s255 = sand.u32 %s23, 1
        %s256 = scalar_lea.sflag [#allocation10], %s255
        %s257 = sand.u32 %s108, 1
        %s258 = smul.addr %s257, 8
        %s259 = scalar_lea.vmem [#allocation11], %s258
        // Predicated region
        $region41: #{tpu_custom_call.1} parent=31 // pred_check
          %p260 = pneg %p121
        $region42: #{tpu_custom_call.1} parent=31 // pred_check_branch
          %262 = sbr.rel (%p260) target = $region44
        $region43: #{tpu_custom_call.1} parent=31 // pred_region
          %264 = dma.done %s256, 128
        $region44: #{tpu_custom_call.1} parent=31 // pred_fallthru
          _
        %s265 = sand.u32 %s52, 1
        %s266 = scalar_lea.sflag [#allocation7], %s265
        %s267 = sand.u32 %s52, 1
        %s268 = smul.addr %s267, 8
        %s269 = scalar_lea.vmem [#allocation6], %s268
        %p270 = pneg %p65
        %p271 = pneg %p62
        %s272 = sand.u32 %s23, 1
        %s273 = scalar_lea.sflag [#allocation10], %s272
        %s274 = sand.u32 %s80, 1
        %s275 = smul.addr %s274, 8
        %s276 = scalar_lea.vmem [#allocation9], %s275
        %p277 = pneg %p93
        %p278 = pneg %p90
        %s279 = sand.u32 %s23, 1
        %s280 = scalar_lea.sflag [#allocation10], %s279
        %s281 = sand.u32 %s108, 1
        %s282 = smul.addr %s281, 8
        %s283 = scalar_lea.vmem [#allocation11], %s282
        %p284 = pneg %p121
        %p285 = pneg %p118
        %p286 = pneg %p149
        %p287 = pneg %p146
        %s288 = sand.u32 %s136, 1
        %s289 = scalar_lea.sflag [#allocation8], %s288
        %s290 = sand.u32 %s136, 1
        %s291 = smul.addr %s290, 8
        %s292 = scalar_lea.vmem [#allocation12], %s291
        %p293 = scmp.eq.s32.totalorder %s30, 0
        // Predicated region
        $region45: #{tpu_custom_call.1} parent=31 // pred_check
          %p294 = pneg %p293
        $region46: #{tpu_custom_call.1} parent=31 // pred_check_branch
          %296 = sbr.rel (%p294) target = $region48
        $region47: #{tpu_custom_call.1} parent=31 // pred_region
          %v297 = vld [vmem:[%s239] sm:$0xff]
          %v298 = vmul.f32 %v297, 0.17677669
          %vm299 = vcmask 261120
          %300 = vst.msk [vmem:[#allocation2] sm:$0xff] %vm299, %v298
          %301 = vst [vmem:[#allocation3] sm:$0xff] -inf
          %302 = vst [vmem:[#allocation4] sm:$0xff] 0.0
          %303 = vst.msk [vmem:[#allocation5] sm:$0xff] %vm299, 0.0
        $region48: #{tpu_custom_call.1} parent=31 // pred_fallthru
          _
        %v304 = vld [vmem:[#allocation2] sm:$0xff]
        %v305 = vld [vmem:[%s249] sm:$0xff]
        %vm306 = vcmask 261120
        %v308 = vsel %vm306, %v304, 0
        %v311 = vsel %vm306, %v305, 0
        %313 = vmatpush.xpose.msra.mxu0 0.0
        %314 = vmatpush.xpose.msra.mxu0 0.0
        %315 = vmatpush.xpose.msra.mxu0 0.0
        %316 = vmatpush.xpose.msra.mxu0 0.0
        %317 = vmatpush.xpose.msra.mxu0 0.0
        %318 = vmatpush.xpose.msra.mxu0 0.0
        %319 = vmatpush.xpose.msra.mxu0 0.0
        %320 = vmatpush.xpose.msra.mxu0 0.0
        %321 = vmatpush.xpose.msra.mxu0 0.0
        %322 = vmatpush.xpose.msra.mxu0 0.0
        %323 = vmatpush.xpose.msra.mxu0 0.0
        %324 = vmatpush.xpose.msra.mxu0 0.0
        %325 = vmatpush.xpose.msra.mxu0 0.0
        %326 = vmatpush.xpose.msra.mxu0 0.0
        %327 = vmatpush.xpose.msra.mxu0 0.0
        %328 = vmatpush.xpose.msra.mxu0 %v311
        %329 = vmatmul.f32.gmra.mxu0 %v308
        %v330 = vpop.f32.mrf.mxu0
        %v331 = vadd.f32 0.0, %v330
        %332 = vdwg.mxu0
        %v333 = vld [vmem:[#allocation3] sm:$0xff]
        %v334 = vld [vmem:[#allocation4] sm:$0xff]
        %vm335 = vcmask 64512
        %v336 = vsel %vm335, %v331, -inf
        %337 = vmax.xlane.f32.xlu0 %v336
        %v338 = vpop.xlane.xlu0 %337
        %v339 = vmax.f32 %v333, %v338
        %v340 = vsub.f32 %v333, %v339
        %v341 = vmul.f32 %v340, 1.442695
        %v342 = vpow.pop %v341
        %344 = vset.pattern.permute.xlu0 0
        %345 = vperm.xlu0 %344, %v339
        %v346 = vpop.permute.xlu0 %345
        %v348 = vsub.f32 %v331, %v346
        %v349 = vmul.f32 %v348, 1.442695
        %v350 = vpow.pop %v349
        %v351 = vmul.f32 %v342, %v334
        %v352 = vsel %vm335, %v350, 0.0
        %353 = vadd.xlane.f32.xlu0 %v352
        %v354 = vpop.xlane.xlu0 %353
        %v355 = vadd.f32 %v351, %v354
        %356 = vst [vmem:[#allocation4] sm:$0xff] %v355
        %357 = vst [vmem:[#allocation3] sm:$0xff] %v339
        %v358 = vld [vmem:[#allocation5] sm:$0xff]
        %360 = vset.pattern.permute.xlu0 0
        %361 = vperm.xlu0 %360, %v342
        %v362 = vpop.permute.xlu0 %361
        %v364 = vmul.f32 %v362, %v358
        %v365 = vld [vmem:[%s259] sm:$0xff]
        %v367 = vsel %vm335, %v350, 0
        %369 = vmatpush.msra.mxu0 0.0
        %370 = vmatpush.msra.mxu0 0.0
        %371 = vmatpush.msra.mxu0 0.0
        %372 = vmatpush.msra.mxu0 0.0
        %373 = vmatpush.msra.mxu0 0.0
        %374 = vmatpush.msra.mxu0 0.0
        %375 = vmatpush.msra.mxu0 0.0
        %376 = vmatpush.msra.mxu0 0.0
        %377 = vmatpush.msra.mxu0 0.0
        %378 = vmatpush.msra.mxu0 0.0
        %379 = vmatpush.msra.mxu0 0.0
        %380 = vmatpush.msra.mxu0 0.0
        %381 = vmatpush.msra.mxu0 0.0
        %382 = vmatpush.msra.mxu0 0.0
        %383 = vmatpush.msra.mxu0 0.0
        %384 = vmatpush.msra.mxu0 %v365
        %385 = vmatmul.f32.gmra.mxu0 %v367
        %v386 = vpop.f32.mrf.mxu0
        %v387 = vadd.f32 0.0, %v386
        %388 = vdwg.mxu0
        %v389 = vadd.f32 %v364, %v387
        %390 = vst.msk [vmem:[#allocation5] sm:$0xff] %vm306, %v389
        // Predicated region
        $region49: #{tpu_custom_call.1} parent=31 // pred_check
          %p391 = pneg %p293
        $region50: #{tpu_custom_call.1} parent=31 // pred_check_branch
          %393 = sbr.rel (%p391) target = $region52
        $region51: #{tpu_custom_call.1} parent=31 // pred_region
          %v394 = vld [vmem:[#allocation4] sm:$0xff]
          %v395 = vrcp.pop %v394
          %v396 = vmul.f32 %v394, %v395
          %v397 = vsub.f32 1.0, %v396
          %v398 = vmul.f32 %v395, %v397
          %v399 = vadd.f32 %v395, %v398
          %vm400 = vweird.f32 %v394
          %vm401 = vweird.f32 %v395
          %vm402 = vmor %vm400, %vm401
          %v403 = vsel %vm402, %v395, %v399
          %v404 = vand.u32 2147483647, %v394
          %vm405 = vcmp.eq.f32.partialorder %v404, 8.507059e+37
          %v406 = vand.u32 %v394, 2147483648
          %v407 = vor.u32 1.1754944e-38, %v406
          %v408 = vsel %vm405, %v407, %v403
          %v409 = vld [vmem:[#allocation5] sm:$0xff]
          %411 = vset.pattern.permute.xlu0 0
          %412 = vperm.xlu0 %411, %v408
          %v413 = vpop.permute.xlu0 %412
          %v415 = vmul.f32 %v409, %v413
          %416 = vst.msk [vmem:[%s292] sm:$0xff] %vm306, %v415
        $region52: #{tpu_custom_call.1} parent=31 // pred_fallthru
          _
        %s417 = sand.u32 %s136, 1
        %s418 = scalar_lea.sflag [#allocation8], %s417
        %s419 = sand.u32 %s136, 1
        %s420 = smul.addr %s419, 8
        %s421 = scalar_lea.vmem [#allocation12], %s420
        // Predicated region
        $region53: #{tpu_custom_call.1} parent=31 // pred_check
          %p422 = pneg %p146
        $region54: #{tpu_custom_call.1} parent=31 // pred_check_branch
          %424 = sbr.rel (%p422) target = $region56
        $region55: #{tpu_custom_call.1} parent=31 // pred_region
          %426 = vsyncadd %s418, 0
          %s427 = sadd.s32 %s29, %s28
          %s428 = smul.addr %s427, 8
          %s429 = scalar_lea.hbm %s3, %s428
          %s431 = sshll.u32 %s421, 4
          %s432 = int_to_ptr.vmem [resolvable:$true] %s431
          %s433 = sshll.u32 %s429, 4
          %s434 = int_to_ptr.hbm [resolvable:$true] %s433
          %436 = dma.vmem_to_hbm [thread:$0]  %s432, 128, %s434, %s418
        $region56: #{tpu_custom_call.1} parent=31 // pred_fallthru
          _
      $region32: #{tpu_custom_call.1} parent=5 // pred_fallthru
        _
      %p437 = scmp.le.s32.totalorder 2, %s18
      // Predicated region
      $region57: #{tpu_custom_call.1} parent=5 // pred_check
        %p438 = pneg %p437
      $region58: #{tpu_custom_call.1} parent=5 // pred_check_branch
        %440 = sbr.rel (%p438) target = $region60
      $region59: #{tpu_custom_call.1} parent=5 // pred_region
        %s441 = ssub.s32 %s18, 2
        // Predicated region
        $region61: #{tpu_custom_call.1} parent=59 // pred_check
          %p442 = pneg %p152
        $region62: #{tpu_custom_call.1} parent=59 // pred_check_branch
          %444 = sbr.rel (%p442) target = $region64
        $region63: #{tpu_custom_call.1} parent=59 // pred_region
          %s445 = sand.u32 %s137, 1
          %s446 = scalar_lea.sflag [#allocation8], %s445
          %s447 = sand.u32 %s137, 1
          %s448 = smul.addr %s447, 8
          %s449 = scalar_lea.vmem [#allocation12], %s448
          %451 = dma.done %s446, 128
        $region64: #{tpu_custom_call.1} parent=59 // pred_fallthru
          _
      $region60: #{tpu_custom_call.1} parent=5 // pred_fallthru
        _
    $region6: #{tpu_custom_call.1} parent=1 // loop_footer
      %s22 = sadd.s32 1, %s18
    $region7: #{tpu_custom_call.1} parent=1 // loop_footer_branch
      %17 = sbr.rel target = $region3
    $region8: #{tpu_custom_call.1} parent=1 // loop_exit
      _
    %452 = vsyncpa [#allocation7], 1
    %s453 = scalar_lea.sflag [#allocation7], 1
    %454 = vsyncpa %s453, 1
    %455 = vsyncpa [#allocation10], 1
    %s456 = scalar_lea.sflag [#allocation10], 1
    %457 = vsyncpa %s456, 1
    %458 = vsyncpa [#allocation8], 1
    %s459 = scalar_lea.sflag [#allocation8], 1
    %460 = vsyncpa %s459, 1

</llo_original>
